<compile_context>
chip_gen: v6e
topology: v6e:2x2x1
jax: 0.10.0
libtpu: 0.0.40
codegen_flags: <defaults>
</compile_context>

<pallas_src>
import functools

import jax
import jax.numpy as jnp
from jax.experimental import pallas as pl
from jax.experimental.pallas import tpu as pltpu


def _reflect_pad(v, axis, size, pad):
    """Reflection pad (PyTorch ReflectionPad2d semantics) along `axis`."""
    if pad == 0:
        return v

    def take(idx):
        sl = [slice(None)] * v.ndim
        sl[axis] = slice(idx, idx + 1)
        return v[tuple(sl)]

    front = [take(i) for i in range(pad, 0, -1)]                    # x[p]..x[1]
    back = [take(i) for i in range(size - 2, size - 2 - pad, -1)]   # x[n-2]..x[n-1-p]
    return jnp.concatenate(front + [v] + back, axis=axis)


def _pixel_gaussian_kernel(x_ref, sigma_ref, out_ref, *, radius, C, H, W):
    """One grid step = one batch element (all C channels).

    x_ref     : (1, C, H, W)  un-padded input planes
    sigma_ref : (1, 1, H, W)  per-pixel sigma, shared across channels
    out_ref   : (1, C, H, W)  output planes
    """
    a = radius // 2
    Wp = W + 2 * a

    x = x_ref[0]                      # (C, H, W)
    sig = sigma_ref[0, 0]             # (H, W)

    # --- single transcendental per pixel ---------------------------------
    # tap weight(i, j) is proportional to t ** (di^2 + dj^2)
    t = jnp.exp(-0.5 * sig)

    # axis powers t**(k*k) for k = 1..a  (k = 0 is the constant 1).
    ax_pow = [None] * (a + 1)
    if a >= 1:
        cur, cur_e = t, 1
        ax_pow[1] = t
        for k in range(2, a + 1):
            while cur_e < k * k:
                cur = cur * t
                cur_e += 1
            ax_pow[k] = cur

    # Separable normalizer: wsum = S**2 with S = 1 + 2*sum_k t**(k*k).
    # A single exact reciprocal, pre-folded into the axis factors so that
    #   weight(i, j) = g[|i-a|] * g[|j-a|] = t**d2 / wsum.
    if a >= 1:
        s = ax_pow[1]
        for k in range(2, a + 1):
            s = s + ax_pow[k]
        inv_s = 1.0 / (1.0 + 2.0 * s)          # exact: keeps 1e-5 tolerance
        g = [inv_s] + [ax_pow[k] * inv_s for k in range(1, a + 1)]
    else:
        g = [jnp.ones_like(sig)]               # radius == 1 degenerate case

    # --- fused reflection padding (VMEM only, no HBM round trip) ----------
    xpad = _reflect_pad(x, axis=1, size=H, pad=a)        # (C, Hp, W)
    xpad = _reflect_pad(xpad, axis=2, size=W, pad=a)     # (C, Hp, Wp)

    # --- tap accumulation --------------------------------------------------
    acc = jnp.zeros((C, H, W), jnp.float32)
    for i in range(radius):
        gi = g[abs(i - a)]
        # Extract the row band once per i (sublane offset); the inner loop
        # only does lane-offset slices of this band.
        band = jax.lax.slice(xpad, (0, i, 0), (C, i + H, Wp))     # (C, H, Wp)
        for j in range(radius):
            w = gi * g[abs(j - a)]                                # (H, W)
            patch = jax.lax.slice(band, (0, 0, j), (C, H, j + W)) # (C, H, W)
            acc = acc + patch * w
    out_ref[0] = acc.astype(out_ref.dtype)


def pixel_gaussian(x, sigma, radius):
    """Pallas implementation of PixelGaussian.forward(x, sigma).

    x     : (B, C, H, W) float32
    sigma : scalar or array broadcastable to (B, 1, H, W)
    """
    assert radius % 2 == 1, "Radius can not be even!"
    B, C, H, W = x.shape
    a = radius // 2
    assert H > a and W > a, "reflection padding requires pad < spatial size"

    x = x.astype(jnp.float32)
    sig = jnp.broadcast_to(jnp.asarray(sigma, jnp.float32), (B, 1, H, W))

    kern = functools.partial(
        _pixel_gaussian_kernel, radius=radius, C=C, H=H, W=W)

    cost = pl.CostEstimate(
        flops=int(B * C * H * W * 3 * radius * radius + B * H * W * 4 * radius),
        transcendentals=int(B * H * W),
        bytes_accessed=int(4 * (2 * B * C * H * W + B * H * W)),
    )

    out = pl.pallas_call(
        kern,
        out_shape=jax.ShapeDtypeStruct((B, C, H, W), jnp.float32),
        grid_spec=pltpu.PrefetchScalarGridSpec(
            num_scalar_prefetch=0,
            grid=(B,),
            in_specs=[
                pl.BlockSpec((1, C, H, W), lambda b: (b, 0, 0, 0)),
                pl.BlockSpec((1, 1, H, W), lambda b: (b, 0, 0, 0)),
            ],
            out_specs=pl.BlockSpec((1, C, H, W), lambda b: (b, 0, 0, 0)),
        ),
        compiler_params=pltpu.CompilerParams(
            dimension_semantics=("parallel",),
        ),
        cost_estimate=cost,
    )(x, sig)
    return out


def pixel_gaussian_ref(x, sigma, radius):
    """Pure-JAX reference mirroring the PyTorch forward."""
    B, C, H, W = x.shape
    a = radius // 2
    pad = (radius - 1) // 2
    xpad = jnp.pad(x, ((0, 0), (0, 0), (pad, pad), (pad, pad)), mode="reflect")
    sig = jnp.broadcast_to(jnp.asarray(sigma, jnp.float32), x.shape)

    ws = []
    for i in range(radius):
        for j in range(radius):
            d2 = float((i - a) ** 2 + (j - a) ** 2)
            ws.append(jnp.exp((-d2 / 2.0) * sig))
    wsum = functools.reduce(lambda p, q: p + q, ws)

    res = jnp.zeros_like(x)
    k = 0
    for i in range(radius):
        for j in range(radius):
            res = res + xpad[:, :, i:i + H, j:j + W] * (ws[k] / wsum)
            k += 1
    return res


if __name__ == "__main__":
    B, C, image_size = 2, 3, 16   # module hard-codes 3 channels

    key = jax.random.PRNGKey(0)
    kx, ks = jax.random.split(key)
    x = jax.random.normal(kx, (B, C, image_size, image_size), dtype=jnp.float32)
    # per-pixel positive sigma map shared across channels (scalar also works)
    sigma = jax.random.uniform(
        ks, (B, 1, image_size, image_size), dtype=jnp.float32,
        minval=0.5, maxval=2.0)

    for radius in (3, 5):
        out = jax.block_until_ready(pixel_gaussian(x, sigma, radius))
        ref = jax.block_until_ready(pixel_gaussian_ref(x, sigma, radius))
        assert out.shape == x.shape and out.dtype == jnp.float32
        err = float(jnp.max(jnp.abs(out - ref)))
        assert jnp.allclose(out, ref, atol=1e-5, rtol=1e-5), err

    print("KERNEL_OK")
</pallas_src>

<mosaic_0001>
module attributes {stable_mosaic.version = 11 : i64} {
  func.func @_pixel_gaussian_kernel(%arg0: i32, %arg1: memref<1x3x16x16xf32, #tpu.memory_space<vmem>>, %arg2: memref<1x1x16x16xf32, #tpu.memory_space<vmem>>, %arg3: memref<1x3x16x16xf32, #tpu.memory_space<vmem>>) attributes {dimension_semantics = [#tpu.dimension_semantics<parallel>], iteration_bounds = array<i64: 2>, scalar_prefetch = 0 : i64, scratch_operands = 0 : i64, tpu.core_type = #tpu.core_type<tc>, window_params = [{transform_indices = @transform_0, window_bounds = array<i64: 1, 3, 16, 16>}, {transform_indices = @transform_1, window_bounds = array<i64: 1, 1, 16, 16>}, {transform_indices = @transform_2, window_bounds = array<i64: 1, 3, 16, 16>}]} {
    %c0 = arith.constant 0 : index
    %c0_0 = arith.constant 0 : index
    %c0_1 = arith.constant 0 : index
    %c0_2 = arith.constant 0 : index
    %0 = vector.load %arg1[%c0, %c0_0, %c0_1, %c0_2] : memref<1x3x16x16xf32, #tpu.memory_space<vmem>>, vector<1x3x16x16xf32>
    %1 = vector.shape_cast %0 : vector<1x3x16x16xf32> to vector<3x16x16xf32>
    %c0_3 = arith.constant 0 : index
    %c0_4 = arith.constant 0 : index
    %c0_5 = arith.constant 0 : index
    %c0_6 = arith.constant 0 : index
    %2 = vector.load %arg2[%c0_3, %c0_4, %c0_5, %c0_6] : memref<1x1x16x16xf32, #tpu.memory_space<vmem>>, vector<1x1x16x16xf32>
    %3 = vector.shape_cast %2 : vector<1x1x16x16xf32> to vector<16x16xf32>
    %cst = arith.constant -5.000000e-01 : f32
    %4 = vector.broadcast %cst : f32 to vector<16x16xf32>
    %5 = arith.mulf %4, %3 : vector<16x16xf32>
    %6 = math.exp %5 : vector<16x16xf32>
    %cst_7 = arith.constant 2.000000e+00 : f32
    %7 = vector.broadcast %cst_7 : f32 to vector<16x16xf32>
    %8 = arith.mulf %7, %6 : vector<16x16xf32>
    %cst_8 = arith.constant 1.000000e+00 : f32
    %9 = vector.broadcast %cst_8 : f32 to vector<16x16xf32>
    %10 = arith.addf %9, %8 : vector<16x16xf32>
    %cst_9 = arith.constant 1.000000e+00 : f32
    %11 = vector.broadcast %cst_9 : f32 to vector<16x16xf32>
    %12 = arith.divf %11, %10 : vector<16x16xf32>
    %13 = arith.mulf %6, %12 : vector<16x16xf32>
    %14 = vector.extract_strided_slice %1 {offsets = [0, 1, 0], sizes = [3, 1, 16], strides = [1, 1, 1]} : vector<3x16x16xf32> to vector<3x1x16xf32>
    %15 = vector.extract_strided_slice %1 {offsets = [0, 14, 0], sizes = [3, 1, 16], strides = [1, 1, 1]} : vector<3x16x16xf32> to vector<3x1x16xf32>
    %16 = tpu.concatenate %14, %1, %15 in 1 : vector<3x1x16xf32>, vector<3x16x16xf32>, vector<3x1x16xf32> -> vector<3x18x16xf32>
    %17 = vector.extract_strided_slice %16 {offsets = [0, 0, 1], sizes = [3, 18, 1], strides = [1, 1, 1]} : vector<3x18x16xf32> to vector<3x18x1xf32>
    %18 = vector.extract_strided_slice %16 {offsets = [0, 0, 14], sizes = [3, 18, 1], strides = [1, 1, 1]} : vector<3x18x16xf32> to vector<3x18x1xf32>
    %19 = tpu.concatenate %17, %16, %18 in 2 : vector<3x18x1xf32>, vector<3x18x16xf32>, vector<3x18x1xf32> -> vector<3x18x18xf32>
    %cst_10 = arith.constant 0.000000e+00 : f32
    %20 = vector.broadcast %cst_10 : f32 to vector<3x16x16xf32>
    %21 = vector.extract_strided_slice %19 {offsets = [0, 0, 0], sizes = [3, 16, 18], strides = [1, 1, 1]} : vector<3x18x18xf32> to vector<3x16x18xf32>
    %22 = arith.mulf %13, %13 : vector<16x16xf32>
    %23 = vector.extract_strided_slice %21 {offsets = [0, 0, 0], sizes = [3, 16, 16], strides = [1, 1, 1]} : vector<3x16x18xf32> to vector<3x16x16xf32>
    %24 = vector.shape_cast %22 : vector<16x16xf32> to vector<1x16x16xf32>
    %25 = vector.broadcast %24 : vector<1x16x16xf32> to vector<3x16x16xf32>
    %26 = arith.mulf %23, %25 : vector<3x16x16xf32>
    %27 = arith.addf %20, %26 : vector<3x16x16xf32>
    %28 = arith.mulf %13, %12 : vector<16x16xf32>
    %29 = vector.extract_strided_slice %21 {offsets = [0, 0, 1], sizes = [3, 16, 16], strides = [1, 1, 1]} : vector<3x16x18xf32> to vector<3x16x16xf32>
    %30 = vector.shape_cast %28 : vector<16x16xf32> to vector<1x16x16xf32>
    %31 = vector.broadcast %30 : vector<1x16x16xf32> to vector<3x16x16xf32>
    %32 = arith.mulf %29, %31 : vector<3x16x16xf32>
    %33 = arith.addf %27, %32 : vector<3x16x16xf32>
    %34 = arith.mulf %13, %13 : vector<16x16xf32>
    %35 = vector.extract_strided_slice %21 {offsets = [0, 0, 2], sizes = [3, 16, 16], strides = [1, 1, 1]} : vector<3x16x18xf32> to vector<3x16x16xf32>
    %36 = vector.shape_cast %34 : vector<16x16xf32> to vector<1x16x16xf32>
    %37 = vector.broadcast %36 : vector<1x16x16xf32> to vector<3x16x16xf32>
    %38 = arith.mulf %35, %37 : vector<3x16x16xf32>
    %39 = arith.addf %33, %38 : vector<3x16x16xf32>
    %40 = vector.extract_strided_slice %19 {offsets = [0, 1, 0], sizes = [3, 16, 18], strides = [1, 1, 1]} : vector<3x18x18xf32> to vector<3x16x18xf32>
    %41 = arith.mulf %12, %13 : vector<16x16xf32>
    %42 = vector.extract_strided_slice %40 {offsets = [0, 0, 0], sizes = [3, 16, 16], strides = [1, 1, 1]} : vector<3x16x18xf32> to vector<3x16x16xf32>
    %43 = vector.shape_cast %41 : vector<16x16xf32> to vector<1x16x16xf32>
    %44 = vector.broadcast %43 : vector<1x16x16xf32> to vector<3x16x16xf32>
    %45 = arith.mulf %42, %44 : vector<3x16x16xf32>
    %46 = arith.addf %39, %45 : vector<3x16x16xf32>
    %47 = arith.mulf %12, %12 : vector<16x16xf32>
    %48 = vector.extract_strided_slice %40 {offsets = [0, 0, 1], sizes = [3, 16, 16], strides = [1, 1, 1]} : vector<3x16x18xf32> to vector<3x16x16xf32>
    %49 = vector.shape_cast %47 : vector<16x16xf32> to vector<1x16x16xf32>
    %50 = vector.broadcast %49 : vector<1x16x16xf32> to vector<3x16x16xf32>
    %51 = arith.mulf %48, %50 : vector<3x16x16xf32>
    %52 = arith.addf %46, %51 : vector<3x16x16xf32>
    %53 = arith.mulf %12, %13 : vector<16x16xf32>
    %54 = vector.extract_strided_slice %40 {offsets = [0, 0, 2], sizes = [3, 16, 16], strides = [1, 1, 1]} : vector<3x16x18xf32> to vector<3x16x16xf32>
    %55 = vector.shape_cast %53 : vector<16x16xf32> to vector<1x16x16xf32>
    %56 = vector.broadcast %55 : vector<1x16x16xf32> to vector<3x16x16xf32>
    %57 = arith.mulf %54, %56 : vector<3x16x16xf32>
    %58 = arith.addf %52, %57 : vector<3x16x16xf32>
    %59 = vector.extract_strided_slice %19 {offsets = [0, 2, 0], sizes = [3, 16, 18], strides = [1, 1, 1]} : vector<3x18x18xf32> to vector<3x16x18xf32>
    %60 = arith.mulf %13, %13 : vector<16x16xf32>
    %61 = vector.extract_strided_slice %59 {offsets = [0, 0, 0], sizes = [3, 16, 16], strides = [1, 1, 1]} : vector<3x16x18xf32> to vector<3x16x16xf32>
    %62 = vector.shape_cast %60 : vector<16x16xf32> to vector<1x16x16xf32>
    %63 = vector.broadcast %62 : vector<1x16x16xf32> to vector<3x16x16xf32>
    %64 = arith.mulf %61, %63 : vector<3x16x16xf32>
    %65 = arith.addf %58, %64 : vector<3x16x16xf32>
    %66 = arith.mulf %13, %12 : vector<16x16xf32>
    %67 = vector.extract_strided_slice %59 {offsets = [0, 0, 1], sizes = [3, 16, 16], strides = [1, 1, 1]} : vector<3x16x18xf32> to vector<3x16x16xf32>
    %68 = vector.shape_cast %66 : vector<16x16xf32> to vector<1x16x16xf32>
    %69 = vector.broadcast %68 : vector<1x16x16xf32> to vector<3x16x16xf32>
    %70 = arith.mulf %67, %69 : vector<3x16x16xf32>
    %71 = arith.addf %65, %70 : vector<3x16x16xf32>
    %72 = arith.mulf %13, %13 : vector<16x16xf32>
    %73 = vector.extract_strided_slice %59 {offsets = [0, 0, 2], sizes = [3, 16, 16], strides = [1, 1, 1]} : vector<3x16x18xf32> to vector<3x16x16xf32>
    %74 = vector.shape_cast %72 : vector<16x16xf32> to vector<1x16x16xf32>
    %75 = vector.broadcast %74 : vector<1x16x16xf32> to vector<3x16x16xf32>
    %76 = arith.mulf %73, %75 : vector<3x16x16xf32>
    %77 = arith.addf %71, %76 : vector<3x16x16xf32>
    %c0_11 = arith.constant 0 : index
    %c0_12 = arith.constant 0 : index
    %c0_13 = arith.constant 0 : index
    %c0_14 = arith.constant 0 : index
    %78 = vector.load %arg3[%c0_11, %c0_12, %c0_13, %c0_14] : memref<1x3x16x16xf32, #tpu.memory_space<vmem>>, vector<1x3x16x16xf32>
    %79 = vector.shape_cast %78 : vector<1x3x16x16xf32> to vector<3x16x16xf32>
    %80 = vector.shape_cast %77 : vector<3x16x16xf32> to vector<1x3x16x16xf32>
    tpu.vector_store %arg3[%c0_11, %c0_12, %c0_13, %c0_14], %80 {strides = array<i32>} : memref<1x3x16x16xf32, #tpu.memory_space<vmem>>, vector<1x3x16x16xf32>,
    return
  }
  func.func @transform_0(%arg0: i32) -> (i32, i32, i32, i32) {
    %c0_i32 = arith.constant 0 : i32
    %c0_i32_0 = arith.constant 0 : i32
    %c0_i32_1 = arith.constant 0 : i32
    %c0_i32_2 = arith.constant 0 : i32
    return %arg0, %c0_i32, %c0_i32_0, %c0_i32_1 : i32, i32, i32, i32
  }
  func.func @transform_1(%arg0: i32) -> (i32, i32, i32, i32) {
    %c0_i32 = arith.constant 0 : i32
    %c0_i32_0 = arith.constant 0 : i32
    %c0_i32_1 = arith.constant 0 : i32
    %c0_i32_2 = arith.constant 0 : i32
    return %arg0, %c0_i32, %c0_i32_0, %c0_i32_1 : i32, i32, i32, i32
  }
  func.func @transform_2(%arg0: i32) -> (i32, i32, i32, i32) {
    %c0_i32 = arith.constant 0 : i32
    %c0_i32_0 = arith.constant 0 : i32
    %c0_i32_1 = arith.constant 0 : i32
    %c0_i32_2 = arith.constant 0 : i32
    return %arg0, %c0_i32, %c0_i32_0, %c0_i32_1 : i32, i32, i32, i32
  }
}

</mosaic_0001>

<llo_original>
// kernel: tpu_custom_call.1
$region0: #{tpu_custom_call.1}
  #allocation0 [shape = 'u32[]', space=smem, size = 0x4, offset = 0x4, fixed_abs, tag = 'smem constant byte address 0x4 - core index']
  #allocation1 [shape = 'u32[144,128]{1,0:T(1,128)}', space=vmem, size = 0x12000, scoped, tag = 'internal scratch']
  %s0 = inlined_call_operand.hbm [shape: f32[2,3,16,16], index: 0, kind: input, shape index: {}]
  %s1 = inlined_call_operand.hbm [shape: f32[2,1,16,16], index: 1, kind: input, shape index: {}]
  %s2 = inlined_call_operand.hbm [shape: f32[2,3,16,16], index: 2, kind: output, shape index: {}]
  %s3 = sld [smem:[#allocation0]]
  $region49: #{tpu_custom_call.1} parent=0
    _
  %s5 = ssub.s32 1, %s3
  %s6 = scalar_select 0, %s5, %s3
  $region1: #{tpu_custom_call.1} parent=0
    #allocation2 [shape = 'u8[49152]{0}', space=vmem, size = 0xc000, scoped, tag = 'input window, operand 0']
    #allocation3 [shape = 's32[2]{0}', space=sflag, size = 0x8, scoped, tag = 'scoped memory for tpu_custom_call.1']
    #allocation4 [shape = 's32[2]{0}', space=sflag, size = 0x8, scoped, tag = 'scoped memory for tpu_custom_call.1']
    #allocation5 [shape = 'u8[16384]{0}', space=vmem, size = 0x4000, scoped, tag = 'input window, operand 1']
    #allocation6 [shape = 's32[2]{0}', space=sflag, size = 0x8, scoped, tag = 'scoped memory for tpu_custom_call.1']
    #allocation7 [shape = 'u8[49152]{0}', space=vmem, size = 0xc000, scoped, tag = 'output window, operand 0']
    %7 = vsyncpa [#allocation3], 0
    %s8 = scalar_lea.sflag [#allocation3], 1
    %9 = vsyncpa %s8, 0
    %10 = vsyncpa [#allocation6], 0
    %s11 = scalar_lea.sflag [#allocation6], 1
    %12 = vsyncpa %s11, 0
    %13 = vsyncpa [#allocation4], 0
    %s14 = scalar_lea.sflag [#allocation4], 1
    %15 = vsyncpa %s14, 0
    loop: start=0, step=1, limit=4
    $region2: #{tpu_custom_call.1} parent=1 // loop_pre_header
      _
    $region3: #{tpu_custom_call.1} parent=1 // loop_header
      %s17 = sphi 0, %s21
      %p18 = scmp.ge.s32.totalorder %s17, 4
      %s27 = sphi 0, %s29
      %s30 = sphi 0, %s27
      %s31 = sphi 0, %s30
      %s47 = sphi 0, %s31
      %s53 = sphi 0, %s55
      %s56 = sphi 0, %s53
      %s57 = sphi 0, %s56
      %s73 = sphi 0, %s57
      %s79 = sphi 0, %s81
      %s82 = sphi 0, %s79
      %s83 = sphi 0, %s82
      %s99 = sphi 0, %s83
    $region4: #{tpu_custom_call.1} parent=1 // loop_header_branch
      %20 = sbr.rel (%p18) target = $region8
    $region5: #{tpu_custom_call.1} parent=1 // loop_body
      %s22 = ssub.s32 %s17, 1
      %s23 = ssub.s32 %s17, 2
      %s24 = sadd.s32 %s17, 1
      %s25 = ssub.s32 %s17, %s24
      %p26 = scmp.eq.s32.totalorder %s25, 0
      %s28 = sadd.s32 %s27, 1
      %s29 = scalar_select %p26, %s27, %s28
      %p32 = pneg %p26
      %p33 = scmp.eq.s32.totalorder %s17, 1
      %p34 = por %p32, %p33
      %p35 = scmp.ne.s32.totalorder %s27, %s30
      %p36 = scmp.eq.s32.totalorder %s17, 0
      %p37 = por %p35, %p36
      %p38 = scmp.ne.s32.totalorder %s27, %s30
      %p39 = scmp.eq.s32.totalorder %s22, 1
      %p40 = por %p38, %p39
      %p41 = scmp.ne.s32.totalorder %s30, %s31
      %p42 = scmp.eq.s32.totalorder %s22, 0
      %p43 = por %p41, %p42
      %p44 = scmp.ne.s32.totalorder %s30, %s31
      %p45 = scmp.eq.s32.totalorder %s23, 1
      %p46 = por %p44, %p45
      %p48 = scmp.ne.s32.totalorder %s31, %s47
      %p49 = scmp.eq.s32.totalorder %s23, 0
      %p50 = por %p48, %p49
      %s51 = ssub.s32 %s17, %s24
      %p52 = scmp.eq.s32.totalorder %s51, 0
      %s54 = sadd.s32 %s53, 1
      %s55 = scalar_select %p52, %s53, %s54
      %p58 = pneg %p52
      %p59 = scmp.eq.s32.totalorder %s17, 1
      %p60 = por %p58, %p59
      %p61 = scmp.ne.s32.totalorder %s53, %s56
      %p62 = scmp.eq.s32.totalorder %s17, 0
      %p63 = por %p61, %p62
      %p64 = scmp.ne.s32.totalorder %s53, %s56
      %p65 = scmp.eq.s32.totalorder %s22, 1
      %p66 = por %p64, %p65
      %p67 = scmp.ne.s32.totalorder %s56, %s57
      %p68 = scmp.eq.s32.totalorder %s22, 0
      %p69 = por %p67, %p68
      %p70 = scmp.ne.s32.totalorder %s56, %s57
      %p71 = scmp.eq.s32.totalorder %s23, 1
      %p72 = por %p70, %p71
      %p74 = scmp.ne.s32.totalorder %s57, %s73
      %p75 = scmp.eq.s32.totalorder %s23, 0
      %p76 = por %p74, %p75
      %s77 = ssub.s32 %s17, %s24
      %p78 = scmp.eq.s32.totalorder %s77, 0
      %s80 = sadd.s32 %s79, 1
      %s81 = scalar_select %p78, %s79, %s80
      %p84 = pneg %p78
      %p85 = scmp.eq.s32.totalorder %s17, 1
      %p86 = por %p84, %p85
      %p87 = scmp.ne.s32.totalorder %s79, %s82
      %p88 = scmp.eq.s32.totalorder %s17, 0
      %p89 = por %p87, %p88
      %p90 = scmp.ne.s32.totalorder %s79, %s82
      %p91 = scmp.eq.s32.totalorder %s22, 1
      %p92 = por %p90, %p91
      %p93 = scmp.ne.s32.totalorder %s82, %s83
      %p94 = scmp.eq.s32.totalorder %s22, 0
      %p95 = por %p93, %p94
      %p96 = scmp.ne.s32.totalorder %s82, %s83
      %p97 = scmp.eq.s32.totalorder %s23, 1
      %p98 = por %p96, %p97
      %p100 = scmp.ne.s32.totalorder %s83, %s99
      %p101 = scmp.eq.s32.totalorder %s23, 0
      %p102 = por %p100, %p101
      %p103 = scmp.le.s32.totalorder 1, %s17
      %p104 = scmp.lt.s32.totalorder %s17, 3
      %p105 = pnand %p103, %p104
      %p106 = pneg %p105
      // Predicated region
      $region9: #{tpu_custom_call.1} parent=5 // pred_check
        _
      $region10: #{tpu_custom_call.1} parent=5 // pred_check_branch
        %108 = sbr.rel (%p105) target = $region12
      $region11: #{tpu_custom_call.1} parent=5 // pred_region
        %s109 = ssub.s32 %s17, 1
      $region12: #{tpu_custom_call.1} parent=5 // pred_fallthru
        _
      %p110 = scmp.lt.s32.totalorder %s17, 2
      // Predicated region
      $region13: #{tpu_custom_call.1} parent=5 // pred_check
        %p111 = pneg %p110
      $region14: #{tpu_custom_call.1} parent=5 // pred_check_branch
        %113 = sbr.rel (%p111) target = $region16
      $region15: #{tpu_custom_call.1} parent=5 // pred_region
        // Predicated region
        $region17: #{tpu_custom_call.1} parent=15 // pred_check
          %p114 = pneg %p37
        $region18: #{tpu_custom_call.1} parent=15 // pred_check_branch
          %116 = sbr.rel (%p114) target = $region20
        $region19: #{tpu_custom_call.1} parent=15 // pred_region
          %s117 = sand.u32 %s27, 1
          %s118 = scalar_lea.sflag [#allocation3], %s117
          %s119 = sand.u32 %s27, 1
          %s120 = smul.addr %s119, 48
          %s121 = scalar_lea.vmem [#allocation2], %s120
          %s123 = ssub.s32 768, 768
          %124 = vsyncadd %s118, %s123
          %s125 = smul.addr %s17, 6
          %s126 = smul.addr %s125, 128
          %s127 = scalar_lea.hbm %s0, %s126
          %s128 = sshll.u32 %s121, 4
          %s129 = int_to_ptr.vmem [resolvable:$true] %s128
          %134 = dma.hbm_to_vmem [thread:$0]  %s127, 768, %s129, %s118, 128, 128, 8
        $region20: #{tpu_custom_call.1} parent=15 // pred_fallthru
          _
        // Predicated region
        $region21: #{tpu_custom_call.1} parent=15 // pred_check
          %p135 = pneg %p63
        $region22: #{tpu_custom_call.1} parent=15 // pred_check_branch
          %137 = sbr.rel (%p135) target = $region24
        $region23: #{tpu_custom_call.1} parent=15 // pred_region
          %s138 = sand.u32 %s53, 1
          %s139 = scalar_lea.sflag [#allocation6], %s138
          %s140 = sand.u32 %s53, 1
          %s141 = smul.addr %s140, 16
          %s142 = scalar_lea.vmem [#allocation5], %s141
          %s144 = ssub.s32 256, 256
          %145 = vsyncadd %s139, %s144
          %s146 = smul.addr %s17, 2
          %s147 = smul.addr %s146, 128
          %s148 = scalar_lea.hbm %s1, %s147
          %s149 = sshll.u32 %s142, 4
          %s150 = int_to_ptr.vmem [resolvable:$true] %s149
          %155 = dma.hbm_to_vmem [thread:$0]  %s148, 256, %s150, %s139, 128, 128, 8
        $region24: #{tpu_custom_call.1} parent=15 // pred_fallthru
          _
      $region16: #{tpu_custom_call.1} parent=5 // pred_fallthru
        _
      %p156 = scmp.le.s32.totalorder 1, %s17
      %p157 = scmp.lt.s32.totalorder %s17, 3
      %p158 = pnand %p156, %p157
      %p159 = pneg %p158
      // Predicated region
      $region25: #{tpu_custom_call.1} parent=5 // pred_check
        _
      $region26: #{tpu_custom_call.1} parent=5 // pred_check_branch
        %161 = sbr.rel (%p158) target = $region28
      $region27: #{tpu_custom_call.1} parent=5 // pred_region
        %s162 = ssub.s32 %s17, 1
        %s163 = sand.u32 %s30, 1
        %s164 = scalar_lea.sflag [#allocation3], %s163
        %s165 = sand.u32 %s30, 1
        %s166 = smul.addr %s165, 48
        %s167 = scalar_lea.vmem [#allocation2], %s166
        // Predicated region
        $region29: #{tpu_custom_call.1} parent=27 // pred_check
          %p168 = pneg %p43
        $region30: #{tpu_custom_call.1} parent=27 // pred_check_branch
          %170 = sbr.rel (%p168) target = $region32
        $region31: #{tpu_custom_call.1} parent=27 // pred_region
          %171 = dma.done %s164, 768
        $region32: #{tpu_custom_call.1} parent=27 // pred_fallthru
          _
        %s172 = sand.u32 %s56, 1
        %s173 = scalar_lea.sflag [#allocation6], %s172
        %s174 = sand.u32 %s56, 1
        %s175 = smul.addr %s174, 16
        %s176 = scalar_lea.vmem [#allocation5], %s175
        // Predicated region
        $region33: #{tpu_custom_call.1} parent=27 // pred_check
          %p177 = pneg %p69
        $region34: #{tpu_custom_call.1} parent=27 // pred_check_branch
          %179 = sbr.rel (%p177) target = $region36
        $region35: #{tpu_custom_call.1} parent=27 // pred_region
          %180 = dma.done %s173, 256
        $region36: #{tpu_custom_call.1} parent=27 // pred_fallthru
          _
        %s181 = sand.u32 %s30, 1
        %s182 = scalar_lea.sflag [#allocation3], %s181
        %s183 = sand.u32 %s30, 1
        %s184 = smul.addr %s183, 48
        %s185 = scalar_lea.vmem [#allocation2], %s184
        %p186 = pneg %p43
        %p187 = pneg %p40
        %s188 = sand.u32 %s56, 1
        %s189 = scalar_lea.sflag [#allocation6], %s188
        %s190 = sand.u32 %s56, 1
        %s191 = smul.addr %s190, 16
        %s192 = scalar_lea.vmem [#allocation5], %s191
        %p193 = pneg %p69
        %p194 = pneg %p66
        %p195 = pneg %p95
        %p196 = pneg %p92
        %s197 = sand.u32 %s82, 1
        %s198 = scalar_lea.sflag [#allocation4], %s197
        %s199 = sand.u32 %s82, 1
        %s200 = smul.addr %s199, 48
        %s201 = scalar_lea.vmem [#allocation7], %s200
        %v202 = vld [vmem:[%s167] sm:$0xff]
        %v203 = vld [vmem:[%s167 + $0x8] sm:$0xff]
        %v204 = vld [vmem:[%s167 + $0x10] sm:$0xff]
        %v205 = vld [vmem:[%s167 + $0x18] sm:$0xff]
        %v206 = vld [vmem:[%s167 + $0x20] sm:$0xff]
        %v207 = vld [vmem:[%s167 + $0x28] sm:$0xff]
        %v208 = vld [vmem:[%s176] sm:$0xff]
        %v209 = vld [vmem:[%s176 + $0x8] sm:$0xff]
        %v210 = vmul.f32 %v208, -0.5
        %v211 = vmul.f32 %v209, -0.5
        %v212 = vmul.f32 %v210, 1.442695
        %v213 = vpow.pop %v212
        %v214 = vmul.f32 %v211, 1.442695
        %v215 = vpow.pop %v214
        %v216 = vmul.f32 %v213, 2.0
        %v217 = vmul.f32 %v215, 2.0
        %v218 = vadd.f32 %v216, 1.0
        %v219 = vadd.f32 %v217, 1.0
        %v220 = vrcp.pop %v218
        %v221 = vmul.f32 1.0, %v220
        %v222 = vrcp.pop %v219
        %v223 = vmul.f32 1.0, %v222
        %v224 = vmul.f32 %v213, %v221
        %v225 = vmul.f32 %v215, %v223
        %v229 = vrot.slane %v202, 1
        %v230 = vrot.slane %v204, 1
        %v231 = vrot.slane %v206, 1
        %vm238 = vcmask 1040384
        %v239 = vrot.slane %v202, 7
        %v240 = vrot.slane %v203, 7
        %v241 = vsel %vm238, %v239, %v240
        %v242 = vrot.slane %v204, 7
        %v243 = vrot.slane %v205, 7
        %v244 = vsel %vm238, %v242, %v243
        %v245 = vrot.slane %v206, 7
        %v246 = vrot.slane %v207, 7
        %v247 = vsel %vm238, %v245, %v246
        %v254 = vrot.slane %v203, 5
        %v255 = vrot.slane %v205, 5
        %v256 = vrot.slane %v207, 5
        %v260 = vsel %vm238, %v229, %v239
        %v261 = vsel %vm238, %v230, %v242
        %v262 = vsel %vm238, %v231, %v245
        %v263 = vsel %vm238, %v240, %v254
        %v264 = vsel %vm238, %v243, %v255
        %v265 = vsel %vm238, %v246, %v256
        %272 = vrot.lane.b32.xlu0 %v260, 127
        %v273 = vpop.permute.xlu0 %272
        %274 = vrot.lane.b32.xlu0 %v241, 127
        %v275 = vpop.permute.xlu0 %274
        %276 = vrot.lane.b32.xlu0 %v263, 127
        %v277 = vpop.permute.xlu0 %276
        %278 = vrot.lane.b32.xlu0 %v261, 127
        %v279 = vpop.permute.xlu0 %278
        %280 = vrot.lane.b32.xlu0 %v244, 127
        %v281 = vpop.permute.xlu0 %280
        %282 = vrot.lane.b32.xlu0 %v264, 127
        %v283 = vpop.permute.xlu0 %282
        %284 = vrot.lane.b32.xlu0 %v262, 127
        %v285 = vpop.permute.xlu0 %284
        %286 = vrot.lane.b32.xlu0 %v247, 127
        %v287 = vpop.permute.xlu0 %286
        %288 = vrot.lane.b32.xlu0 %v265, 127
        %v289 = vpop.permute.xlu0 %288
        %299 = vrot.lane.b32.xlu0 %v260, 1
        %v300 = vpop.permute.xlu0 %299
        %301 = vrot.lane.b32.xlu0 %v241, 1
        %v302 = vpop.permute.xlu0 %301
        %303 = vrot.lane.b32.xlu0 %v263, 1
        %v304 = vpop.permute.xlu0 %303
        %305 = vrot.lane.b32.xlu0 %v261, 1
        %v306 = vpop.permute.xlu0 %305
        %307 = vrot.lane.b32.xlu0 %v244, 1
        %v308 = vpop.permute.xlu0 %307
        %309 = vrot.lane.b32.xlu0 %v264, 1
        %v310 = vpop.permute.xlu0 %309
        %311 = vrot.lane.b32.xlu0 %v262, 1
        %v312 = vpop.permute.xlu0 %311
        %313 = vrot.lane.b32.xlu0 %v247, 1
        %v314 = vpop.permute.xlu0 %313
        %315 = vrot.lane.b32.xlu0 %v265, 1
        %v316 = vpop.permute.xlu0 %315
        %326 = vrot.lane.b32.xlu0 %v260, 3
        %v327 = vpop.permute.xlu0 %326
        %328 = vrot.lane.b32.xlu0 %v241, 3
        %v329 = vpop.permute.xlu0 %328
        %330 = vrot.lane.b32.xlu0 %v263, 3
        %v331 = vpop.permute.xlu0 %330
        %332 = vrot.lane.b32.xlu0 %v261, 3
        %v333 = vpop.permute.xlu0 %332
        %334 = vrot.lane.b32.xlu0 %v244, 3
        %v335 = vpop.permute.xlu0 %334
        %336 = vrot.lane.b32.xlu0 %v264, 3
        %v337 = vpop.permute.xlu0 %336
        %338 = vrot.lane.b32.xlu0 %v262, 3
        %v339 = vpop.permute.xlu0 %338
        %340 = vrot.lane.b32.xlu0 %v247, 3
        %v341 = vpop.permute.xlu0 %340
        %342 = vrot.lane.b32.xlu0 %v265, 3
        %v343 = vpop.permute.xlu0 %342
        %vm353 = vcmask 7168
        %v354 = vsel %vm353, %v273, %v300
        %v355 = vsel %vm353, %v275, %v302
        %v356 = vsel %vm353, %v277, %v304
        %v357 = vsel %vm353, %v279, %v306
        %v358 = vsel %vm353, %v281, %v308
        %v359 = vsel %vm353, %v283, %v310
        %v360 = vsel %vm353, %v285, %v312
        %v361 = vsel %vm353, %v287, %v314
        %v362 = vsel %vm353, %v289, %v316
        %vm363 = vcmask 138240
        %v364 = vsel %vm363, %v354, %v327
        %v365 = vsel %vm363, %v355, %v329
        %v366 = vsel %vm363, %v356, %v331
        %v367 = vsel %vm363, %v357, %v333
        %v368 = vsel %vm363, %v358, %v335
        %v369 = vsel %vm363, %v359, %v337
        %v370 = vsel %vm363, %v360, %v339
        %v371 = vsel %vm363, %v361, %v341
        %v372 = vsel %vm363, %v362, %v343
        %v373 = vmul.f32 %v224, %v224
        %v374 = vmul.f32 %v225, %v225
        %v375 = vmul.f32 %v364, %v373
        %v376 = vmul.f32 %v365, %v374
        %v377 = vmul.f32 %v367, %v373
        %v378 = vmul.f32 %v368, %v374
        %v379 = vmul.f32 %v370, %v373
        %v380 = vmul.f32 %v371, %v374
        %v381 = vadd.f32 %v375, 0.0
        %v382 = vadd.f32 %v376, 0.0
        %v383 = vadd.f32 %v377, 0.0
        %v384 = vadd.f32 %v378, 0.0
        %v385 = vadd.f32 %v379, 0.0
        %v386 = vadd.f32 %v380, 0.0
        %v387 = vmul.f32 %v224, %v221
        %v388 = vmul.f32 %v225, %v223
        %391 = vrot.lane.b32.xlu0 %v387, 1
        %v392 = vpop.permute.xlu0 %391
        %393 = vrot.lane.b32.xlu0 %v388, 1
        %v394 = vpop.permute.xlu0 %393
        %v397 = vmul.f32 %v364, %v392
        %v398 = vmul.f32 %v365, %v394
        %v399 = vmul.f32 %v367, %v392
        %v400 = vmul.f32 %v368, %v394
        %v401 = vmul.f32 %v370, %v392
        %v402 = vmul.f32 %v371, %v394
        %409 = vrot.lane.b32.xlu0 %v397, 127
        %v410 = vpop.permute.xlu0 %409
        %411 = vrot.lane.b32.xlu0 %v398, 127
        %v412 = vpop.permute.xlu0 %411
        %413 = vrot.lane.b32.xlu0 %v399, 127
        %v414 = vpop.permute.xlu0 %413
        %415 = vrot.lane.b32.xlu0 %v400, 127
        %v416 = vpop.permute.xlu0 %415
        %417 = vrot.lane.b32.xlu0 %v401, 127
        %v418 = vpop.permute.xlu0 %417
        %419 = vrot.lane.b32.xlu0 %v402, 127
        %v420 = vpop.permute.xlu0 %419
        %v427 = vadd.f32 %v381, %v410
        %v428 = vadd.f32 %v382, %v412
        %v429 = vadd.f32 %v383, %v414
        %v430 = vadd.f32 %v384, %v416
        %v431 = vadd.f32 %v385, %v418
        %v432 = vadd.f32 %v386, %v420
        %435 = vrot.lane.b32.xlu0 %v373, 2
        %v436 = vpop.permute.xlu0 %435
        %437 = vrot.lane.b32.xlu0 %v374, 2
        %v438 = vpop.permute.xlu0 %437
        %v441 = vmul.f32 %v364, %v436
        %v442 = vmul.f32 %v365, %v438
        %v443 = vmul.f32 %v367, %v436
        %v444 = vmul.f32 %v368, %v438
        %v445 = vmul.f32 %v370, %v436
        %v446 = vmul.f32 %v371, %v438
        %453 = vrot.lane.b32.xlu0 %v441, 126
        %v454 = vpop.permute.xlu0 %453
        %455 = vrot.lane.b32.xlu0 %v442, 126
        %v456 = vpop.permute.xlu0 %455
        %457 = vrot.lane.b32.xlu0 %v443, 126
        %v458 = vpop.permute.xlu0 %457
        %459 = vrot.lane.b32.xlu0 %v444, 126
        %v460 = vpop.permute.xlu0 %459
        %461 = vrot.lane.b32.xlu0 %v445, 126
        %v462 = vpop.permute.xlu0 %461
        %463 = vrot.lane.b32.xlu0 %v446, 126
        %v464 = vpop.permute.xlu0 %463
        %v471 = vadd.f32 %v427, %v454
        %v472 = vadd.f32 %v428, %v456
        %v473 = vadd.f32 %v429, %v458
        %v474 = vadd.f32 %v430, %v460
        %v475 = vadd.f32 %v431, %v462
        %v476 = vadd.f32 %v432, %v464
        %v477 = vrot.slane %v387, 7
        %v478 = vrot.slane %v388, 7
        %v479 = vsel %vm238, %v477, %v478
        %v483 = vmul.f32 %v364, %v477
        %v484 = vmul.f32 %v365, %v479
        %v485 = vmul.f32 %v366, %v478
        %v486 = vmul.f32 %v367, %v477
        %v487 = vmul.f32 %v368, %v479
        %v488 = vmul.f32 %v369, %v478
        %v489 = vmul.f32 %v370, %v477
        %v490 = vmul.f32 %v371, %v479
        %v491 = vmul.f32 %v372, %v478
        %vm501 = vcmask 1046528
        %v502 = vrot.slane %v483, 1
        %v503 = vrot.slane %v484, 1
        %v504 = vsel %vm501, %v502, %v503
        %v505 = vrot.slane %v485, 1
        %v506 = vsel %vm501, %v503, %v505
        %v507 = vrot.slane %v486, 1
        %v508 = vrot.slane %v487, 1
        %v509 = vsel %vm501, %v507, %v508
        %v510 = vrot.slane %v488, 1
        %v511 = vsel %vm501, %v508, %v510
        %v512 = vrot.slane %v489, 1
        %v513 = vrot.slane %v490, 1
        %v514 = vsel %vm501, %v512, %v513
        %v515 = vrot.slane %v491, 1
        %v516 = vsel %vm501, %v513, %v515
        %v523 = vadd.f32 %v471, %v504
        %v524 = vadd.f32 %v472, %v506
        %v525 = vadd.f32 %v473, %v509
        %v526 = vadd.f32 %v474, %v511
        %v527 = vadd.f32 %v475, %v514
        %v528 = vadd.f32 %v476, %v516
        %v529 = vmul.f32 %v221, %v221
        %v530 = vmul.f32 %v223, %v223
        %v533 = vrot.slane %v529, 7
        %v534 = vrot.slane %v530, 7
        %v535 = vsel %vm238, %v533, %v534
        %536 = vrot.lane.b32.xlu0 %v533, 1
        %v537 = vpop.permute.xlu0 %536
        %538 = vrot.lane.b32.xlu0 %v535, 1
        %v539 = vpop.permute.xlu0 %538
        %540 = vrot.lane.b32.xlu0 %v534, 1
        %v541 = vpop.permute.xlu0 %540
        %v545 = vmul.f32 %v364, %v537
        %v546 = vmul.f32 %v365, %v539
        %v547 = vmul.f32 %v366, %v541
        %v548 = vmul.f32 %v367, %v537
        %v549 = vmul.f32 %v368, %v539
        %v550 = vmul.f32 %v369, %v541
        %v551 = vmul.f32 %v370, %v537
        %v552 = vmul.f32 %v371, %v539
        %v553 = vmul.f32 %v372, %v541
        %v563 = vrot.slane %v545, 1
        %v564 = vrot.slane %v546, 1
        %v565 = vsel %vm501, %v563, %v564
        %v566 = vrot.slane %v547, 1
        %v567 = vsel %vm501, %v564, %v566
        %v568 = vrot.slane %v548, 1
        %v569 = vrot.slane %v549, 1
        %v570 = vsel %vm501, %v568, %v569
        %v571 = vrot.slane %v550, 1
        %v572 = vsel %vm501, %v569, %v571
        %v573 = vrot.slane %v551, 1
        %v574 = vrot.slane %v552, 1
        %v575 = vsel %vm501, %v573, %v574
        %v576 = vrot.slane %v553, 1
        %v577 = vsel %vm501, %v574, %v576
        %578 = vrot.lane.b32.xlu0 %v565, 127
        %v579 = vpop.permute.xlu0 %578
        %580 = vrot.lane.b32.xlu0 %v567, 127
        %v581 = vpop.permute.xlu0 %580
        %582 = vrot.lane.b32.xlu0 %v570, 127
        %v583 = vpop.permute.xlu0 %582
        %584 = vrot.lane.b32.xlu0 %v572, 127
        %v585 = vpop.permute.xlu0 %584
        %586 = vrot.lane.b32.xlu0 %v575, 127
        %v587 = vpop.permute.xlu0 %586
        %588 = vrot.lane.b32.xlu0 %v577, 127
        %v589 = vpop.permute.xlu0 %588
        %v596 = vadd.f32 %v523, %v579
        %v597 = vadd.f32 %v524, %v581
        %v598 = vadd.f32 %v525, %v583
        %v599 = vadd.f32 %v526, %v585
        %v600 = vadd.f32 %v527, %v587
        %v601 = vadd.f32 %v528, %v589
        %602 = vrot.lane.b32.xlu0 %v477, 2
        %v603 = vpop.permute.xlu0 %602
        %604 = vrot.lane.b32.xlu0 %v479, 2
        %v605 = vpop.permute.xlu0 %604
        %606 = vrot.lane.b32.xlu0 %v478, 2
        %v607 = vpop.permute.xlu0 %606
        %v611 = vmul.f32 %v364, %v603
        %v612 = vmul.f32 %v365, %v605
        %v613 = vmul.f32 %v366, %v607
        %v614 = vmul.f32 %v367, %v603
        %v615 = vmul.f32 %v368, %v605
        %v616 = vmul.f32 %v369, %v607
        %v617 = vmul.f32 %v370, %v603
        %v618 = vmul.f32 %v371, %v605
        %v619 = vmul.f32 %v372, %v607
        %v629 = vrot.slane %v611, 1
        %v630 = vrot.slane %v612, 1
        %v631 = vsel %vm501, %v629, %v630
        %v632 = vrot.slane %v613, 1
        %v633 = vsel %vm501, %v630, %v632
        %v634 = vrot.slane %v614, 1
        %v635 = vrot.slane %v615, 1
        %v636 = vsel %vm501, %v634, %v635
        %v637 = vrot.slane %v616, 1
        %v638 = vsel %vm501, %v635, %v637
        %v639 = vrot.slane %v617, 1
        %v640 = vrot.slane %v618, 1
        %v641 = vsel %vm501, %v639, %v640
        %v642 = vrot.slane %v619, 1
        %v643 = vsel %vm501, %v640, %v642
        %644 = vrot.lane.b32.xlu0 %v631, 126
        %v645 = vpop.permute.xlu0 %644
        %646 = vrot.lane.b32.xlu0 %v633, 126
        %v647 = vpop.permute.xlu0 %646
        %648 = vrot.lane.b32.xlu0 %v636, 126
        %v649 = vpop.permute.xlu0 %648
        %650 = vrot.lane.b32.xlu0 %v638, 126
        %v651 = vpop.permute.xlu0 %650
        %652 = vrot.lane.b32.xlu0 %v641, 126
        %v653 = vpop.permute.xlu0 %652
        %654 = vrot.lane.b32.xlu0 %v643, 126
        %v655 = vpop.permute.xlu0 %654
        %v662 = vadd.f32 %v596, %v645
        %v663 = vadd.f32 %v597, %v647
        %v664 = vadd.f32 %v598, %v649
        %v665 = vadd.f32 %v599, %v651
        %v666 = vadd.f32 %v600, %v653
        %v667 = vadd.f32 %v601, %v655
        %vm668 = vcmask 1041408
        %v669 = vrot.slane %v373, 6
        %v670 = vrot.slane %v374, 6
        %v671 = vsel %vm668, %v669, %v670
        %v675 = vmul.f32 %v364, %v669
        %v676 = vmul.f32 %v365, %v671
        %v677 = vmul.f32 %v366, %v670
        %v678 = vmul.f32 %v367, %v669
        %v679 = vmul.f32 %v368, %v671
        %v680 = vmul.f32 %v369, %v670
        %v681 = vmul.f32 %v370, %v669
        %v682 = vmul.f32 %v371, %v671
        %v683 = vmul.f32 %v372, %v670
        %vm693 = vcmask 1045504
        %v694 = vrot.slane %v675, 2
        %v695 = vrot.slane %v676, 2
        %v696 = vsel %vm693, %v694, %v695
        %v697 = vrot.slane %v677, 2
        %v698 = vsel %vm693, %v695, %v697
        %v699 = vrot.slane %v678, 2
        %v700 = vrot.slane %v679, 2
        %v701 = vsel %vm693, %v699, %v700
        %v702 = vrot.slane %v680, 2
        %v703 = vsel %vm693, %v700, %v702
        %v704 = vrot.slane %v681, 2
        %v705 = vrot.slane %v682, 2
        %v706 = vsel %vm693, %v704, %v705
        %v707 = vrot.slane %v683, 2
        %v708 = vsel %vm693, %v705, %v707
        %v715 = vadd.f32 %v662, %v696
        %v716 = vadd.f32 %v663, %v698
        %v717 = vadd.f32 %v664, %v701
        %v718 = vadd.f32 %v665, %v703
        %v719 = vadd.f32 %v666, %v706
        %v720 = vadd.f32 %v667, %v708
        %v721 = vrot.slane %v387, 6
        %v722 = vrot.slane %v388, 6
        %v723 = vsel %vm668, %v721, %v722
        %724 = vrot.lane.b32.xlu0 %v721, 1
        %v725 = vpop.permute.xlu0 %724
        %726 = vrot.lane.b32.xlu0 %v723, 1
        %v727 = vpop.permute.xlu0 %726
        %728 = vrot.lane.b32.xlu0 %v722, 1
        %v729 = vpop.permute.xlu0 %728
        %v733 = vmul.f32 %v364, %v725
        %v734 = vmul.f32 %v365, %v727
        %v735 = vmul.f32 %v366, %v729
        %v736 = vmul.f32 %v367, %v725
        %v737 = vmul.f32 %v368, %v727
        %v738 = vmul.f32 %v369, %v729
        %v739 = vmul.f32 %v370, %v725
        %v740 = vmul.f32 %v371, %v727
        %v741 = vmul.f32 %v372, %v729
        %v751 = vrot.slane %v733, 2
        %v752 = vrot.slane %v734, 2
        %v753 = vsel %vm693, %v751, %v752
        %v754 = vrot.slane %v735, 2
        %v755 = vsel %vm693, %v752, %v754
        %v756 = vrot.slane %v736, 2
        %v757 = vrot.slane %v737, 2
        %v758 = vsel %vm693, %v756, %v757
        %v759 = vrot.slane %v738, 2
        %v760 = vsel %vm693, %v757, %v759
        %v761 = vrot.slane %v739, 2
        %v762 = vrot.slane %v740, 2
        %v763 = vsel %vm693, %v761, %v762
        %v764 = vrot.slane %v741, 2
        %v765 = vsel %vm693, %v762, %v764
        %766 = vrot.lane.b32.xlu0 %v753, 127
        %v767 = vpop.permute.xlu0 %766
        %768 = vrot.lane.b32.xlu0 %v755, 127
        %v769 = vpop.permute.xlu0 %768
        %770 = vrot.lane.b32.xlu0 %v758, 127
        %v771 = vpop.permute.xlu0 %770
        %772 = vrot.lane.b32.xlu0 %v760, 127
        %v773 = vpop.permute.xlu0 %772
        %774 = vrot.lane.b32.xlu0 %v763, 127
        %v775 = vpop.permute.xlu0 %774
        %776 = vrot.lane.b32.xlu0 %v765, 127
        %v777 = vpop.permute.xlu0 %776
        %v784 = vadd.f32 %v715, %v767
        %v785 = vadd.f32 %v716, %v769
        %v786 = vadd.f32 %v717, %v771
        %v787 = vadd.f32 %v718, %v773
        %v788 = vadd.f32 %v719, %v775
        %v789 = vadd.f32 %v720, %v777
        %790 = vrot.lane.b32.xlu0 %v669, 2
        %v791 = vpop.permute.xlu0 %790
        %792 = vrot.lane.b32.xlu0 %v671, 2
        %v793 = vpop.permute.xlu0 %792
        %794 = vrot.lane.b32.xlu0 %v670, 2
        %v795 = vpop.permute.xlu0 %794
        %v799 = vmul.f32 %v364, %v791
        %v800 = vmul.f32 %v365, %v793
        %v801 = vmul.f32 %v366, %v795
        %v802 = vmul.f32 %v367, %v791
        %v803 = vmul.f32 %v368, %v793
        %v804 = vmul.f32 %v369, %v795
        %v805 = vmul.f32 %v370, %v791
        %v806 = vmul.f32 %v371, %v793
        %v807 = vmul.f32 %v372, %v795
        %v817 = vrot.slane %v799, 2
        %v818 = vrot.slane %v800, 2
        %v819 = vsel %vm693, %v817, %v818
        %v820 = vrot.slane %v801, 2
        %v821 = vsel %vm693, %v818, %v820
        %v822 = vrot.slane %v802, 2
        %v823 = vrot.slane %v803, 2
        %v824 = vsel %vm693, %v822, %v823
        %v825 = vrot.slane %v804, 2
        %v826 = vsel %vm693, %v823, %v825
        %v827 = vrot.slane %v805, 2
        %v828 = vrot.slane %v806, 2
        %v829 = vsel %vm693, %v827, %v828
        %v830 = vrot.slane %v807, 2
        %v831 = vsel %vm693, %v828, %v830
        %832 = vrot.lane.b32.xlu0 %v819, 126
        %v833 = vpop.permute.xlu0 %832
        %834 = vrot.lane.b32.xlu0 %v821, 126
        %v835 = vpop.permute.xlu0 %834
        %836 = vrot.lane.b32.xlu0 %v824, 126
        %v837 = vpop.permute.xlu0 %836
        %838 = vrot.lane.b32.xlu0 %v826, 126
        %v839 = vpop.permute.xlu0 %838
        %840 = vrot.lane.b32.xlu0 %v829, 126
        %v841 = vpop.permute.xlu0 %840
        %842 = vrot.lane.b32.xlu0 %v831, 126
        %v843 = vpop.permute.xlu0 %842
        %v850 = vadd.f32 %v784, %v833
        %v851 = vadd.f32 %v785, %v835
        %v852 = vadd.f32 %v786, %v837
        %v853 = vadd.f32 %v787, %v839
        %v854 = vadd.f32 %v788, %v841
        %v855 = vadd.f32 %v789, %v843
        %vm856 = vcmask 130048
        %857 = vst.msk [vmem:[%s201] sm:$0xff] %vm856, %v850
        %858 = vst.msk [vmem:[%s201 + $0x8] sm:$0xff] %vm856, %v851
        %859 = vst.msk [vmem:[%s201 + $0x10] sm:$0xff] %vm856, %v852
        %860 = vst.msk [vmem:[%s201 + $0x18] sm:$0xff] %vm856, %v853
        %861 = vst.msk [vmem:[%s201 + $0x20] sm:$0xff] %vm856, %v854
        %862 = vst.msk [vmem:[%s201 + $0x28] sm:$0xff] %vm856, %v855
        %s863 = sand.u32 %s82, 1
        %s864 = scalar_lea.sflag [#allocation4], %s863
        %s865 = sand.u32 %s82, 1
        %s866 = smul.addr %s865, 48
        %s867 = scalar_lea.vmem [#allocation7], %s866
        // Predicated region
        $region37: #{tpu_custom_call.1} parent=27 // pred_check
          %p868 = pneg %p92
        $region38: #{tpu_custom_call.1} parent=27 // pred_check_branch
          %870 = sbr.rel (%p868) target = $region40
        $region39: #{tpu_custom_call.1} parent=27 // pred_region
          %s872 = ssub.s32 768, 768
          %873 = vsyncadd %s864, %s872
          %s874 = smul.addr %s22, 6
          %s875 = smul.addr %s874, 128
          %s876 = scalar_lea.hbm %s2, %s875
          %s877 = sshll.u32 %s867, 4
          %s878 = int_to_ptr.vmem [resolvable:$true] %s877
          %883 = dma.vmem_to_hbm [thread:$0]  %s878, 768, %s876, %s864, 128, 128, 8
        $region40: #{tpu_custom_call.1} parent=27 // pred_fallthru
          _
      $region28: #{tpu_custom_call.1} parent=5 // pred_fallthru
        _
      %p884 = scmp.le.s32.totalorder 2, %s17
      // Predicated region
      $region41: #{tpu_custom_call.1} parent=5 // pred_check
        %p885 = pneg %p884
      $region42: #{tpu_custom_call.1} parent=5 // pred_check_branch
        %887 = sbr.rel (%p885) target = $region44
      $region43: #{tpu_custom_call.1} parent=5 // pred_region
        %s888 = ssub.s32 %s17, 2
        // Predicated region
        $region45: #{tpu_custom_call.1} parent=43 // pred_check
          %p889 = pneg %p98
        $region46: #{tpu_custom_call.1} parent=43 // pred_check_branch
          %891 = sbr.rel (%p889) target = $region48
        $region47: #{tpu_custom_call.1} parent=43 // pred_region
          %s892 = sand.u32 %s83, 1
          %s893 = scalar_lea.sflag [#allocation4], %s892
          %s894 = sand.u32 %s83, 1
          %s895 = smul.addr %s894, 48
          %s896 = scalar_lea.vmem [#allocation7], %s895
          %897 = dma.done %s893, 768
        $region48: #{tpu_custom_call.1} parent=43 // pred_fallthru
          _
      $region44: #{tpu_custom_call.1} parent=5 // pred_fallthru
        _
    $region6: #{tpu_custom_call.1} parent=1 // loop_footer
      %s21 = sadd.s32 1, %s17
    $region7: #{tpu_custom_call.1} parent=1 // loop_footer_branch
      %16 = sbr.rel target = $region3
    $region8: #{tpu_custom_call.1} parent=1 // loop_exit
      _
    %898 = vsyncpa [#allocation3], 1
    %s899 = scalar_lea.sflag [#allocation3], 1
    %900 = vsyncpa %s899, 1
    %901 = vsyncpa [#allocation6], 1
    %s902 = scalar_lea.sflag [#allocation6], 1
    %903 = vsyncpa %s902, 1
    %904 = vsyncpa [#allocation4], 1
    %s905 = scalar_lea.sflag [#allocation4], 1
    %906 = vsyncpa %s905, 1

</llo_original>
